<compile_context>
chip_gen: v5e
topology: v5e:2x2
jax: 0.10.0
libtpu: 0.0.40
codegen_flags: <defaults>
</compile_context>

<pallas_src>
import functools

import jax
import jax.numpy as jnp
from jax.experimental import pallas as pl
from jax.experimental.pallas import tpu as pltpu

_LANE = 128
_SUBLANE_BF16 = 16
_EPS = 1e-5


def _linear_bn_kernel(x_ref, w_ref, gb_ref, o_ref, acc_ref, *,
                      relu, n_valid, n_padded):
    """Fused Linear(bias dropped) -> BatchNorm1d(train) [-> ReLU] layer tile.

    grid = (C_out/Tc, K/Tk).  axis 0: channel tiles ("parallel"),
    axis 1: contraction tiles ("arbitrary", innermost).  The f32 accumulator
    lives in VMEM scratch; the BN/ReLU/cast epilogue is a single fused pass.
    """
    k = pl.program_id(1)

    @pl.when(k == 0)
    def _():
        acc_ref[...] = jnp.zeros_like(acc_ref)

    acc_ref[...] += jnp.dot(x_ref[...], w_ref[...],
                            preferred_element_type=jnp.float32)

    @pl.when(k == pl.num_programs(1) - 1)
    def _():
        h = acc_ref[...]                                    # one read of the tile
        inv_n = 1.0 / n_valid                               # padded rows are exactly 0
        s = jnp.sum(h, axis=0, keepdims=True)               # [1, Tc]
        ssq = jnp.sum(h * h, axis=0, keepdims=True)         # [1, Tc]
        mean = s * inv_n
        var = jnp.maximum(ssq * inv_n - mean * mean, 0.0)   # guard cancellation
        gamma = gb_ref[0:1, :]
        beta = gb_ref[1:2, :]
        scale = gamma * jax.lax.rsqrt(var + _EPS)            # [1, Tc]
        shift = beta - mean * scale                          # [1, Tc]
        out = h * scale + shift                              # fused VPU pass
        if relu:
            out = jnp.maximum(out, 0.0)
        if n_padded > n_valid:
            # Keep padded batch rows exactly zero so the next layer's BN
            # statistics (which divide by n_valid) remain exact.
            rows = jax.lax.broadcasted_iota(jnp.int32, out.shape, 0)
            out = jnp.where(rows < n_valid, out, 0.0)
        o_ref[...] = out.astype(o_ref.dtype)                 # cast folded into store


def _round_up(n, m):
    return pl.cdiv(n, m) * m


def _pick_tile(dim, pref):
    """Largest power-of-two tile <= pref that divides dim (dim is a 128-multiple)."""
    t = pref
    while t > _LANE and dim % t != 0:
        t //= 2
    return min(t, dim)


def _pad2(a, rows, cols):
    return jnp.pad(a, ((0, rows - a.shape[0]), (0, cols - a.shape[1])))


def _pack_gb(gamma, beta, cpad):
    gb = jnp.stack([gamma, beta], axis=0)                    # [2, C]
    return jnp.pad(gb, ((0, 0), (0, cpad - gb.shape[1]))).astype(jnp.float32)


def _linear_bn_layer(x_pad, w_pad, gb_pad, *, relu, n_valid, out_dtype):
    """x_pad: [Np, Kp] bf16, w_pad: [Kp, Cp] bf16, gb_pad: [2, Cp] f32."""
    n_padded, kp = x_pad.shape
    _, cp = w_pad.shape
    tc = _pick_tile(cp, 256)       # 256-wide channel tiles feed the 2x256x256 MXU
    tk = _pick_tile(kp, 512)       # <=512-lane contraction tiles (2 MiB bf16 w2 tile)
    grid = (cp // tc, kp // tk)

    out_isize = jnp.dtype(out_dtype).itemsize
    # Double-buffered input/output tiles + f32 accumulator scratch + headroom.
    vmem_bytes = (2 * (n_padded * tk * 2)            # x tile (bf16)
                  + 2 * (tk * tc * 2)                # w tile (bf16)
                  + 2 * (2 * tc * 4)                 # gamma/beta tile
                  + 2 * (n_padded * tc * out_isize)  # out tile
                  + n_padded * tc * 4)               # accumulator
    vmem_bytes = min(int(vmem_bytes * 1.5) + (2 << 20), 64 * 1024 * 1024)

    kern = functools.partial(_linear_bn_kernel, relu=relu,
                             n_valid=n_valid, n_padded=n_padded)

    return pl.pallas_call(
        kern,
        out_shape=jax.ShapeDtypeStruct((n_padded, cp), out_dtype),
        grid=grid,
        in_specs=[
            pl.BlockSpec((n_padded, tk), lambda c, k: (0, k)),   # activations
            pl.BlockSpec((tk, tc), lambda c, k: (k, c)),         # weights
            pl.BlockSpec((2, tc), lambda c, k: (0, c)),          # gamma/beta
        ],
        out_specs=pl.BlockSpec((n_padded, tc), lambda c, k: (0, c)),
        scratch_shapes=[pltpu.VMEM((n_padded, tc), jnp.float32)],
        compiler_params=pltpu.CompilerParams(
            dimension_semantics=("parallel", "arbitrary"),
            vmem_limit_bytes=vmem_bytes),
    )(x_pad, w_pad, gb_pad)


def projector_forward(x, params):
    """x: [N, in_dim] float32. params stores Linear weights as [in, out]."""
    n, in_dim = x.shape
    hidden_dim = params["w1"].shape[1]
    out_dim = params["w3"].shape[1]

    kp = _round_up(in_dim, _LANE)
    hp = _round_up(hidden_dim, _LANE)
    op = _round_up(out_dim, _LANE)
    np_ = _round_up(n, _SUBLANE_BF16)        # bf16 sublane packing

    xp = jnp.pad(x, ((0, np_ - n), (0, kp - in_dim))).astype(jnp.bfloat16)
    w1 = _pad2(params["w1"], kp, hp).astype(jnp.bfloat16)
    w2 = _pad2(params["w2"], hp, hp).astype(jnp.bfloat16)
    w3 = _pad2(params["w3"], hp, op).astype(jnp.bfloat16)
    gb1 = _pack_gb(params["g1"], params["be1"], hp)
    gb2 = _pack_gb(params["g2"], params["be2"], hp)
    gb3 = _pack_gb(params["g3"], params["be3"], op)

    # Layers 1/2 emit bf16 (halves inter-layer activation traffic); the final
    # layer emits f32 to match the PyTorch module's output dtype.
    h = _linear_bn_layer(xp, w1, gb1, relu=True, n_valid=n, out_dtype=jnp.bfloat16)
    h = _linear_bn_layer(h, w2, gb2, relu=True, n_valid=n, out_dtype=jnp.bfloat16)
    h = _linear_bn_layer(h, w3, gb3, relu=False, n_valid=n, out_dtype=jnp.float32)

    return h[:n, :out_dim]


def init_params(key, in_dim, hidden_dim, out_dim):
    """PyTorch-style init. Linear weights stored pre-transposed as [in, out]."""
    ks = jax.random.split(key, 6)

    def linear(kw, kb, fan_in, fan_out):
        bound = 1.0 / jnp.sqrt(fan_in)
        w = jax.random.uniform(kw, (fan_in, fan_out), jnp.float32, -bound, bound)
        b = jax.random.uniform(kb, (fan_out,), jnp.float32, -bound, bound)
        return w, b

    w1, b1 = linear(ks[0], ks[1], in_dim, hidden_dim)
    w2, b2 = linear(ks[2], ks[3], hidden_dim, hidden_dim)
    w3, b3 = linear(ks[4], ks[5], hidden_dim, out_dim)

    return {
        "w1": w1, "b1": b1,
        "g1": jnp.ones((hidden_dim,), jnp.float32),
        "be1": jnp.zeros((hidden_dim,), jnp.float32),
        "w2": w2, "b2": b2,
        "g2": jnp.ones((hidden_dim,), jnp.float32),
        "be2": jnp.zeros((hidden_dim,), jnp.float32),
        "w3": w3, "b3": b3,
        "g3": jnp.ones((out_dim,), jnp.float32),
        "be3": jnp.zeros((out_dim,), jnp.float32),
    }


def projector_reference(x, p):
    """Pure-JAX f32 reference of the PyTorch module (with Linear biases)."""
    def bn(h, g, b, relu):
        m = jnp.mean(h, axis=0, keepdims=True)
        v = jnp.mean((h - m) ** 2, axis=0, keepdims=True)
        o = (h - m) / jnp.sqrt(v + _EPS) * g + b
        return jnp.maximum(o, 0.0) if relu else o

    h = bn(x @ p["w1"] + p["b1"], p["g1"], p["be1"], True)
    h = bn(h @ p["w2"] + p["b2"], p["g2"], p["be2"], True)
    h = bn(h @ p["w3"] + p["b3"], p["g3"], p["be3"], False)
    return h


if __name__ == "__main__":
    key = jax.random.PRNGKey(0)
    k_x, k_p = jax.random.split(key)

    N, in_dim, hidden_dim, out_dim = 8, 32, 32, 16
    x = jax.random.normal(k_x, (N, in_dim), jnp.float32)
    params = init_params(k_p, in_dim, hidden_dim, out_dim)

    out = jax.block_until_ready(projector_forward(x, params))
    ref = projector_reference(x, params)

    assert out.shape == (N, out_dim)
    # bf16 MXU operands + bf16 inter-layer activations + bias-free formulation
    # => slightly looser tolerance than a pure-f32 comparison.
    assert jnp.allclose(out, ref, atol=5e-2, rtol=5e-2), "mismatch vs reference"

    print("KERNEL_OK")
</pallas_src>

<mosaic_0001>
module attributes {stable_mosaic.version = 11 : i64} {
  func.func @_linear_bn_kernel(%arg0: i32, %arg1: i32, %arg2: memref<16x128xbf16, #tpu.memory_space<vmem>>, %arg3: memref<128x128xbf16, #tpu.memory_space<vmem>>, %arg4: memref<2x128xf32, #tpu.memory_space<vmem>>, %arg5: memref<16x128xbf16, #tpu.memory_space<vmem>>, %arg6: memref<16x128xf32, #tpu.memory_space<vmem>>) attributes {dimension_semantics = [#tpu.dimension_semantics<parallel>, #tpu.dimension_semantics<arbitrary>], iteration_bounds = array<i64: 1, 1>, scalar_prefetch = 0 : i64, scratch_operands = 1 : i64, tpu.core_type = #tpu.core_type<tc>, window_params = [{transform_indices = @transform_0, window_bounds = array<i64: 16, 128>}, {transform_indices = @transform_1, window_bounds = array<i64: 128, 128>}, {transform_indices = @transform_2, window_bounds = array<i64: 2, 128>}, {transform_indices = @transform_3, window_bounds = array<i64: 16, 128>}]} {
    %c0_i32 = arith.constant 0 : i32
    %0 = arith.cmpi eq, %arg1, %c0_i32 : i32
    %1 = arith.extui %0 : i1 to i32
    %c0_i32_0 = arith.constant 0 : i32
    %2 = arith.cmpi ne, %1, %c0_i32_0 : i32
    scf.if %2 {
      %cst_10 = arith.constant 0.000000e+00 : f32
      %12 = vector.broadcast %cst_10 : f32 to vector<16x128xf32>
      %c0_11 = arith.constant 0 : index
      %c0_12 = arith.constant 0 : index
      %13 = vector.load %arg6[%c0_11, %c0_12] : memref<16x128xf32, #tpu.memory_space<vmem>>, vector<16x128xf32>
      tpu.vector_store %arg6[%c0_11, %c0_12], %12 {strides = array<i32>} : memref<16x128xf32, #tpu.memory_space<vmem>>, vector<16x128xf32>,
    } else {
    }
    %c0 = arith.constant 0 : index
    %c0_1 = arith.constant 0 : index
    %3 = vector.load %arg6[%c0, %c0_1] : memref<16x128xf32, #tpu.memory_space<vmem>>, vector<16x128xf32>
    %c0_2 = arith.constant 0 : index
    %c0_3 = arith.constant 0 : index
    %4 = vector.load %arg2[%c0_2, %c0_3] : memref<16x128xbf16, #tpu.memory_space<vmem>>, vector<16x128xbf16>
    %c0_4 = arith.constant 0 : index
    %c0_5 = arith.constant 0 : index
    %5 = vector.load %arg3[%c0_4, %c0_5] : memref<128x128xbf16, #tpu.memory_space<vmem>>, vector<128x128xbf16>
    %cst = arith.constant dense<0.000000e+00> : vector<16x128xf32>
    %6 = tpu.matmul %4, %5, %cst {dimension_numbers = #tpu.dot_dimension_numbers<[1], [0], [0], [1], [0, 0, 1, 1], [], []>} : vector<16x128xbf16>, vector<128x128xbf16>, vector<16x128xf32> -> vector<16x128xf32>
    %7 = arith.addf %3, %6 : vector<16x128xf32>
    %c0_6 = arith.constant 0 : index
    %c0_7 = arith.constant 0 : index
    %8 = vector.load %arg6[%c0_6, %c0_7] : memref<16x128xf32, #tpu.memory_space<vmem>>, vector<16x128xf32>
    tpu.vector_store %arg6[%c0_6, %c0_7], %7 {strides = array<i32>} : memref<16x128xf32, #tpu.memory_space<vmem>>, vector<16x128xf32>,
    %c0_i32_8 = arith.constant 0 : i32
    %9 = arith.cmpi eq, %arg1, %c0_i32_8 : i32
    %10 = arith.extui %9 : i1 to i32
    %c0_i32_9 = arith.constant 0 : i32
    %11 = arith.cmpi ne, %10, %c0_i32_9 : i32
    scf.if %11 {
      %c0_10 = arith.constant 0 : index
      %c0_11 = arith.constant 0 : index
      %12 = vector.load %arg6[%c0_10, %c0_11] : memref<16x128xf32, #tpu.memory_space<vmem>>, vector<16x128xf32>
      %cst_12 = arith.constant dense<0.000000e+00> : vector<128xf32>
      %13 = vector.multi_reduction <add>, %12, %cst_12 [0] : vector<16x128xf32> to vector<128xf32>
      %14 = vector.shape_cast %13 : vector<128xf32> to vector<1x128xf32>
      %15 = arith.mulf %12, %12 : vector<16x128xf32>
      %cst_13 = arith.constant dense<0.000000e+00> : vector<128xf32>
      %16 = vector.multi_reduction <add>, %15, %cst_13 [0] : vector<16x128xf32> to vector<128xf32>
      %17 = vector.shape_cast %16 : vector<128xf32> to vector<1x128xf32>
      %cst_14 = arith.constant 1.250000e-01 : f32
      %18 = vector.broadcast %cst_14 : f32 to vector<1x128xf32>
      %19 = arith.mulf %14, %18 : vector<1x128xf32>
      %cst_15 = arith.constant 1.250000e-01 : f32
      %20 = vector.broadcast %cst_15 : f32 to vector<1x128xf32>
      %21 = arith.mulf %17, %20 : vector<1x128xf32>
      %22 = arith.mulf %19, %19 : vector<1x128xf32>
      %23 = arith.subf %21, %22 : vector<1x128xf32>
      %cst_16 = arith.constant 0.000000e+00 : f32
      %24 = vector.broadcast %cst_16 : f32 to vector<1x128xf32>
      %25 = arith.maximumf %23, %24 : vector<1x128xf32>
      %c0_17 = arith.constant 0 : index
      %c0_18 = arith.constant 0 : index
      %26 = vector.load %arg4[%c0_17, %c0_18] : memref<2x128xf32, #tpu.memory_space<vmem>>, vector<1x128xf32>
      %c1 = arith.constant 1 : index
      %c0_19 = arith.constant 0 : index
      %27 = vector.load %arg4[%c1, %c0_19] : memref<2x128xf32, #tpu.memory_space<vmem>>, vector<1x128xf32>
      %cst_20 = arith.constant 9.99999974E-6 : f32
      %28 = vector.broadcast %cst_20 : f32 to vector<1x128xf32>
      %29 = arith.addf %25, %28 : vector<1x128xf32>
      %30 = math.rsqrt %29 : vector<1x128xf32>
      %31 = arith.mulf %26, %30 : vector<1x128xf32>
      %32 = arith.mulf %19, %31 : vector<1x128xf32>
      %33 = arith.subf %27, %32 : vector<1x128xf32>
      %34 = vector.broadcast %31 : vector<1x128xf32> to vector<16x128xf32>
      %35 = arith.mulf %12, %34 : vector<16x128xf32>
      %36 = vector.broadcast %33 : vector<1x128xf32> to vector<16x128xf32>
      %37 = arith.addf %35, %36 : vector<16x128xf32>
      %cst_21 = arith.constant 0.000000e+00 : f32
      %38 = vector.broadcast %cst_21 : f32 to vector<16x128xf32>
      %39 = arith.maximumf %37, %38 : vector<16x128xf32>
      %40 = tpu.iota {dimensions = array<i32: 0>} : vector<16x128xi32>
      %c8_i32 = arith.constant 8 : i32
      %41 = vector.broadcast %c8_i32 : i32 to vector<16x128xi32>
      %42 = arith.cmpi slt, %40, %41 : vector<16x128xi32>
      %cst_22 = arith.constant 0.000000e+00 : f32
      %43 = vector.broadcast %cst_22 : f32 to vector<16x128xf32>
      %44 = arith.select %42, %39, %43 : vector<16x128xi1>, vector<16x128xf32>
      %45 = arith.truncf %44 : vector<16x128xf32> to vector<16x128xbf16>
      %c0_23 = arith.constant 0 : index
      %c0_24 = arith.constant 0 : index
      %46 = vector.load %arg5[%c0_23, %c0_24] : memref<16x128xbf16, #tpu.memory_space<vmem>>, vector<16x128xbf16>
      tpu.vector_store %arg5[%c0_23, %c0_24], %45 {strides = array<i32>} : memref<16x128xbf16, #tpu.memory_space<vmem>>, vector<16x128xbf16>,
    } else {
    }
    return
  }
  func.func @transform_0(%arg0: i32, %arg1: i32) -> (i32, i32) {
    %c0_i32 = arith.constant 0 : i32
    %c0_i32_0 = arith.constant 0 : i32
    return %c0_i32, %arg1 : i32, i32
  }
  func.func @transform_1(%arg0: i32, %arg1: i32) -> (i32, i32) {
    %c0_i32 = arith.constant 0 : i32
    return %arg1, %arg0 : i32, i32
  }
  func.func @transform_2(%arg0: i32, %arg1: i32) -> (i32, i32) {
    %c0_i32 = arith.constant 0 : i32
    %c0_i32_0 = arith.constant 0 : i32
    return %c0_i32, %arg0 : i32, i32
  }
  func.func @transform_3(%arg0: i32, %arg1: i32) -> (i32, i32) {
    %c0_i32 = arith.constant 0 : i32
    %c0_i32_0 = arith.constant 0 : i32
    return %c0_i32, %arg0 : i32, i32
  }
}

</mosaic_0001>

<llo_original>
// kernel: tpu_custom_call.1
$region0: #{tpu_custom_call.1}
  #allocation0 [shape = 'u32[]', space=smem, size = 0x4, offset = 0x4, fixed_abs, tag = 'smem constant byte address 0x4 - core index']
  #allocation1 [shape = 'u32[72,128]{1,0:T(1,128)}', space=vmem, size = 0x9000, scoped, tag = 'internal scratch']
  #allocation2 [shape = 'f32[16,128]{1,0:T(8,128)}', space=vmem, size = 0x2000, scoped, tag = 'scratch operand']
  %s0 = inlined_call_operand.hbm [shape: bf16[16,128], index: 0, kind: input, shape index: {}]
  %s1 = inlined_call_operand.hbm [shape: bf16[128,128], index: 1, kind: input, shape index: {}]
  %s2 = inlined_call_operand.hbm [shape: f32[2,128], index: 2, kind: input, shape index: {}]
  %s3 = inlined_call_operand.hbm [shape: bf16[16,128], index: 3, kind: output, shape index: {}]
  %s4 = sld [smem:[#allocation0]]
  $region42: #{tpu_custom_call.1} parent=0
    _
  %s6 = ssub.s32 1, %s4
  %s7 = scalar_select 0, %s6, %s4
  $region1: #{tpu_custom_call.1} parent=0
    #allocation3 [shape = 'u8[4096]{0}', space=vmem, size = 0x1000, scoped, tag = 'input window, operand 0, single buffered']
    #allocation4 [shape = 's32[1]{0}', space=sflag, size = 0x4, scoped, tag = 'scoped memory for tpu_custom_call.1']
    #allocation5 [shape = 's32[1]{0}', space=sflag, size = 0x4, scoped, tag = 'scoped memory for tpu_custom_call.1']
    #allocation6 [shape = 'u8[32768]{0}', space=vmem, size = 0x8000, scoped, tag = 'input window, operand 1, single buffered']
    #allocation7 [shape = 's32[1]{0}', space=sflag, size = 0x4, scoped, tag = 'scoped memory for tpu_custom_call.1']
    #allocation8 [shape = 'u8[1024]{0}', space=vmem, size = 0x400, scoped, tag = 'input window, operand 2, single buffered']
    #allocation9 [shape = 'u8[4096]{0}', space=vmem, size = 0x1000, scoped, tag = 'output window, operand 0, single buffered']
    %8 = vsyncpa [#allocation4], 0
    %9 = vsyncpa [#allocation7], 0
    %10 = vsyncpa [#allocation5], 0
    // Predicated region
    $region2: #{tpu_custom_call.1} parent=1 // pred_check
      _
    $region3: #{tpu_custom_call.1} parent=1 // pred_check_branch
      %12 = sbr.rel (0) target = $region5
    $region4: #{tpu_custom_call.1} parent=1 // pred_region
      %14 = vsyncadd [#allocation4], 0
      %s15 = sshll.u32 %s0, 4
      %s16 = int_to_ptr.hbm [resolvable:$true] %s15
      %s17 = sshll.u32 [#allocation3], 4
      %s18 = int_to_ptr.vmem [resolvable:$true] %s17
      %23 = dma.hbm_to_vmem [thread:$0]  %s16, 128, %s18, [#allocation4], 64, 64, 4
    $region5: #{tpu_custom_call.1} parent=1 // pred_fallthru
      _
    // Predicated region
    $region6: #{tpu_custom_call.1} parent=1 // pred_check
      _
    $region7: #{tpu_custom_call.1} parent=1 // pred_check_branch
      %25 = sbr.rel (0) target = $region9
    $region8: #{tpu_custom_call.1} parent=1 // pred_region
      %27 = vsyncadd [#allocation7], 0
      %s28 = sshll.u32 %s1, 4
      %s29 = int_to_ptr.hbm [resolvable:$true] %s28
      %s30 = sshll.u32 [#allocation6], 4
      %s31 = int_to_ptr.vmem [resolvable:$true] %s30
      %36 = dma.hbm_to_vmem [thread:$0]  %s29, 1024, %s31, [#allocation7], 64, 64, 4
    $region9: #{tpu_custom_call.1} parent=1 // pred_fallthru
      _
    // Predicated region
    $region10: #{tpu_custom_call.1} parent=1 // pred_check
      _
    $region11: #{tpu_custom_call.1} parent=1 // pred_check_branch
      %38 = sbr.rel (0) target = $region13
    $region12: #{tpu_custom_call.1} parent=1 // pred_region
      %40 = vsyncadd [#allocation7], 0
      %s42 = sshll.u32 %s2, 4
      %s43 = int_to_ptr.hbm [resolvable:$true] %s42
      %s44 = sshll.u32 [#allocation8], 4
      %s45 = int_to_ptr.vmem [resolvable:$true] %s44
      %47 = dma.hbm_to_vmem [thread:$0]  %s43, 32, %s45, [#allocation7]
    $region13: #{tpu_custom_call.1} parent=1 // pred_fallthru
      _
    // Predicated region
    $region14: #{tpu_custom_call.1} parent=1 // pred_check
      _
    $region15: #{tpu_custom_call.1} parent=1 // pred_check_branch
      %49 = sbr.rel (0) target = $region17
    $region16: #{tpu_custom_call.1} parent=1 // pred_region
      %51 = dma.done [#allocation4], 128
    $region17: #{tpu_custom_call.1} parent=1 // pred_fallthru
      _
    // Predicated region
    $region18: #{tpu_custom_call.1} parent=1 // pred_check
      _
    $region19: #{tpu_custom_call.1} parent=1 // pred_check_branch
      %53 = sbr.rel (0) target = $region21
    $region20: #{tpu_custom_call.1} parent=1 // pred_region
      %55 = dma.done [#allocation7], 1024
    $region21: #{tpu_custom_call.1} parent=1 // pred_fallthru
      _
    // Predicated region
    $region22: #{tpu_custom_call.1} parent=1 // pred_check
      _
    $region23: #{tpu_custom_call.1} parent=1 // pred_check_branch
      %57 = sbr.rel (0) target = $region25
    $region24: #{tpu_custom_call.1} parent=1 // pred_region
      %59 = dma.done [#allocation7], 32
    $region25: #{tpu_custom_call.1} parent=1 // pred_fallthru
      _
    %p60 = scmp.eq.s32.totalorder 0, 0
    // Predicated region
    $region26: #{tpu_custom_call.1} parent=1 // pred_check
      %p61 = pneg %p60
    $region27: #{tpu_custom_call.1} parent=1 // pred_check_branch
      %63 = sbr.rel (%p61) target = $region29
    $region28: #{tpu_custom_call.1} parent=1 // pred_region
      %64 = vst [vmem:[#allocation2] sm:$0xff] 0.0
      %65 = vst [vmem:[#allocation2 + $0x8] sm:$0xff] 0.0
    $region29: #{tpu_custom_call.1} parent=1 // pred_fallthru
      _
    %v66 = vld [vmem:[#allocation2] sm:$0xff]
    %v67 = vld [vmem:[#allocation2 + $0x8] sm:$0xff]
    %v68 = vld [vmem:[#allocation3] sm:$0xf]
    %v69 = vld [vmem:[#allocation3 + $0x4] sm:$0xf]
    %v70 = vld [vmem:[#allocation6] sm:$0xf]
    %v71 = vld [vmem:[#allocation6 + $0x4] sm:$0xf]
    %v72 = vld [vmem:[#allocation6 + $0x8] sm:$0xf]
    %v73 = vld [vmem:[#allocation6 + $0xc] sm:$0xf]
    %v74 = vld [vmem:[#allocation6 + $0x10] sm:$0xf]
    %v75 = vld [vmem:[#allocation6 + $0x14] sm:$0xf]
    %v76 = vld [vmem:[#allocation6 + $0x18] sm:$0xf]
    %v77 = vld [vmem:[#allocation6 + $0x1c] sm:$0xf]
    %v78 = vld [vmem:[#allocation6 + $0x20] sm:$0xf]
    %v79 = vld [vmem:[#allocation6 + $0x24] sm:$0xf]
    %v80 = vld [vmem:[#allocation6 + $0x28] sm:$0xf]
    %v81 = vld [vmem:[#allocation6 + $0x2c] sm:$0xf]
    %v82 = vld [vmem:[#allocation6 + $0x30] sm:$0xf]
    %v83 = vld [vmem:[#allocation6 + $0x34] sm:$0xf]
    %v84 = vld [vmem:[#allocation6 + $0x38] sm:$0xf]
    %v85 = vld [vmem:[#allocation6 + $0x3c] sm:$0xf]
    %v88 = vunpack.c.l.b16 %v68
    %v89 = vunpack.c.l.b16 %v69
    %v90 = vpack.c.b16 %v89, %v88
    %v108 = vunpack.c.l.b16 %v70
    %v109 = vunpack.c.l.b16 %v71
    %v110 = vunpack.c.l.b16 %v72
    %v111 = vunpack.c.l.b16 %v73
    %v112 = vunpack.c.l.b16 %v74
    %v113 = vunpack.c.l.b16 %v75
    %v114 = vunpack.c.l.b16 %v76
    %v115 = vunpack.c.l.b16 %v77
    %v116 = vunpack.c.l.b16 %v78
    %v117 = vunpack.c.l.b16 %v79
    %v118 = vunpack.c.l.b16 %v80
    %v119 = vunpack.c.l.b16 %v81
    %v120 = vunpack.c.l.b16 %v82
    %v121 = vunpack.c.l.b16 %v83
    %v122 = vunpack.c.l.b16 %v84
    %v123 = vunpack.c.l.b16 %v85
    %v124 = vpack.c.b16 %v109, %v108
    %v125 = vpack.c.b16 %v111, %v110
    %v126 = vpack.c.b16 %v113, %v112
    %v127 = vpack.c.b16 %v115, %v114
    %v128 = vpack.c.b16 %v117, %v116
    %v129 = vpack.c.b16 %v119, %v118
    %v130 = vpack.c.b16 %v121, %v120
    %v131 = vpack.c.b16 %v123, %v122
    %140 = vmatpush.bf16.msra.mxu0 %v131
    %141 = vmatpush.bf16.msra.mxu0 %v130
    %142 = vmatpush.bf16.msra.mxu0 %v129
    %143 = vmatpush.bf16.msra.mxu0 %v128
    %144 = vmatpush.bf16.msra.mxu0 %v127
    %145 = vmatpush.bf16.msra.mxu0 %v126
    %146 = vmatpush.bf16.msra.mxu0 %v125
    %147 = vmatpush.bf16.msra.mxu0 %v124
    %148 = vmatmul.bf16.gmra.mxu0 %v90
    %v149 = vpop.f32.mrf.mxu0
    %v150 = vadd.f32 0.0, %v149
    %v151 = vpop.f32.mrf.mxu0
    %v152 = vadd.f32 0.0, %v151
    %153 = vdwg.mxu0
    %v154 = vadd.f32 %v66, %v150
    %v155 = vadd.f32 %v67, %v152
    %156 = vst [vmem:[#allocation2] sm:$0xff] %v154
    %157 = vst [vmem:[#allocation2 + $0x8] sm:$0xff] %v155
    // Predicated region
    $region30: #{tpu_custom_call.1} parent=1 // pred_check
      %p158 = pneg %p60
    $region31: #{tpu_custom_call.1} parent=1 // pred_check_branch
      %160 = sbr.rel (%p158) target = $region33
    $region32: #{tpu_custom_call.1} parent=1 // pred_region
      %v161 = vld [vmem:[#allocation2] sm:$0xff]
      %v162 = vld [vmem:[#allocation2 + $0x8] sm:$0xff]
      %v163 = vadd.f32 %v161, %v162
      %v164 = vrot.slane %v163, 4
      %v165 = vadd.f32 %v163, %v164
      %v166 = vrot.slane %v165, 2
      %v167 = vadd.f32 %v165, %v166
      %v168 = vrot.slane %v167, 1
      %v169 = vadd.f32 %v167, %v168
      %v170 = vmul.f32 %v161, %v161
      %v171 = vmul.f32 %v162, %v162
      %v172 = vadd.f32 %v170, %v171
      %v173 = vrot.slane %v172, 4
      %v174 = vadd.f32 %v172, %v173
      %v175 = vrot.slane %v174, 2
      %v176 = vadd.f32 %v174, %v175
      %v177 = vrot.slane %v176, 1
      %v178 = vadd.f32 %v176, %v177
      %v179 = vmul.f32 %v169, 0.125
      %v180 = vmul.f32 %v178, 0.125
      %v181 = vmul.f32 %v179, %v179
      %v182 = vsub.f32 %v180, %v181
      %v183 = vmax.f32 %v182, 0.0
      %v184 = vld [vmem:[#allocation8] sm:$0x1]
      %v185 = vld [vmem:[#allocation8 + $0x1] sm:$0x1]
      %v186 = vadd.f32 %v183, 1e-05
      %v187 = vrsqrt.pop %v186
      %v188 = vmul.f32 %v187, %v186
      %v189 = vmul.f32 %v188, %v187
      %v190 = vmul.f32 0.5, %v189
      %v191 = vsub.f32 1.5, %v190
      %v192 = vmul.f32 %v187, %v191
      %vm193 = vweird.f32 %v186
      %vm194 = vweird.f32 %v187
      %vm195 = vmor %vm193, %vm194
      %v196 = vsel %vm195, %v187, %v192
      %v197 = vmul.f32 %v184, %v196
      %v198 = vmul.f32 %v179, %v197
      %v199 = vsub.f32 %v185, %v198
      %v200 = vperm.slane %v197, 0
      %v201 = vmul.f32 %v161, %v200
      %v202 = vmul.f32 %v162, %v200
      %v203 = vperm.slane %v199, 0
      %v204 = vadd.f32 %v201, %v203
      %v205 = vadd.f32 %v202, %v203
      %v206 = vmax.f32 %v204, 0.0
      %v207 = vmax.f32 %v205, 0.0
      %v208 = vlaneseq
      %v209 = vshrl.u32 %v208, 7
      %v210 = vadd.s32 %v209, 8
      %vm211 = vcmp.lt.s32.totalorder %v209, 8
      %vm212 = vcmp.lt.s32.totalorder %v210, 8
      %v213 = vsel %vm211, %v206, 0.0
      %v214 = vsel %vm212, %v207, 0.0
      %v215 = vpack.c.bf16 %v213, %v213
      %v216 = vpack.c.bf16 %v214, %v214
      %217 = vst [vmem:[#allocation9] sm:$0xf] %v215
      %218 = vst [vmem:[#allocation9 + $0x4] sm:$0xf] %v216
    $region33: #{tpu_custom_call.1} parent=1 // pred_fallthru
      _
    // Predicated region
    $region34: #{tpu_custom_call.1} parent=1 // pred_check
      _
    $region35: #{tpu_custom_call.1} parent=1 // pred_check_branch
      %220 = sbr.rel (0) target = $region37
    $region36: #{tpu_custom_call.1} parent=1 // pred_region
      %222 = vsyncadd [#allocation5], 0
      %s223 = sshll.u32 [#allocation9], 4
      %s224 = int_to_ptr.vmem [resolvable:$true] %s223
      %s225 = sshll.u32 %s3, 4
      %s226 = int_to_ptr.hbm [resolvable:$true] %s225
      %231 = dma.vmem_to_hbm [thread:$0]  %s224, 128, %s226, [#allocation5], 64, 64, 4
    $region37: #{tpu_custom_call.1} parent=1 // pred_fallthru
      _
    // Predicated region
    $region38: #{tpu_custom_call.1} parent=1 // pred_check
      _
    $region39: #{tpu_custom_call.1} parent=1 // pred_check_branch
      %233 = sbr.rel (0) target = $region41
    $region40: #{tpu_custom_call.1} parent=1 // pred_region
      %235 = dma.done [#allocation5], 128
    $region41: #{tpu_custom_call.1} parent=1 // pred_fallthru
      _
    %236 = vsyncpa [#allocation4], 1
    %237 = vsyncpa [#allocation7], 1
    %238 = vsyncpa [#allocation5], 1

</llo_original>
